<compile_context>
chip_gen: v7x
topology: tpu7x:2x2x1
jax: 0.10.0
libtpu: 0.0.40
codegen_flags: <defaults>
</compile_context>

<pallas_src>
import jax
import jax.numpy as jnp
from jax.experimental import pallas as pl
from jax.experimental.pallas import tpu as pltpu

NEG_SLOPE = 0.01   # nn.LeakyReLU default negative_slope
LANE = 128
SUBLANE = 8


def _leaky_relu(x):
    return jnp.where(x > 0, x, NEG_SLOPE * x)


def _round_up(x, m):
    return ((x + m - 1) // m) * m


def mlp_kernel(x_ref, w1_ref, b1_ref, w2_ref, b2_ref, w3_ref, b3_ref, o_ref):
    # layer 1: bf16 x bf16 -> f32 on the MXU, f32 bias add + LeakyReLU
    h1 = jnp.dot(x_ref[...], w1_ref[...], preferred_element_type=jnp.float32) + b1_ref[...]
    h1 = _leaky_relu(h1).astype(w2_ref.dtype)          # back to bf16 for the next MXU pass
    # layer 2
    h2 = jnp.dot(h1, w2_ref[...], preferred_element_type=jnp.float32) + b2_ref[...]
    h2 = _leaky_relu(h2).astype(w3_ref.dtype)
    # output layer (no activation), lane-dense (padded-to-128) store
    out = jnp.dot(h2, w3_ref[...], preferred_element_type=jnp.float32) + b3_ref[...]
    o_ref[...] = out.astype(o_ref.dtype)


def prediction_network_forward(x, params):
    """x: (B, inSize) float32. params: dict w1,b1,w2,b2,w3,b3 with weights in (in,out) layout."""
    w1, b1 = params["w1"], params["b1"]
    w2, b2 = params["w2"], params["b2"]
    w3, b3 = params["w3"], params["b3"]
    B, in_size = x.shape
    out_size = w3.shape[1]

    # bf16 storage for MXU inputs; biases stay f32 (added to f32 accumulator).
    x_bf = x.astype(jnp.bfloat16)
    w1_bf = w1.astype(jnp.bfloat16)
    w2_bf = w2.astype(jnp.bfloat16)

    # Lane-dense output: pad the final layer to a multiple of 128 output lanes.
    out_pad = _round_up(out_size, LANE)
    w3_p = jnp.pad(w3.astype(jnp.bfloat16), ((0, 0), (0, out_pad - out_size)))
    b3_p = jnp.pad(b3, ((0, 0), (0, out_pad - out_size)))

    # Batch tiling: TM=256 for big batches (pipelined DMA + megacore sharding),
    # otherwise a single sublane-aligned tile.
    tm = 256 if B >= 256 else _round_up(B, SUBLANE)
    b_pad = _round_up(B, tm)
    if b_pad != B:
        x_bf = jnp.pad(x_bf, ((0, b_pad - B), (0, 0)))

    out = pl.pallas_call(
        mlp_kernel,
        out_shape=jax.ShapeDtypeStruct((b_pad, out_pad), jnp.float32),
        grid=(b_pad // tm,),
        in_specs=[
            pl.BlockSpec((tm, in_size), lambda i: (i, 0)),        # x tile per grid step
            pl.BlockSpec(w1_bf.shape, lambda i: (0, 0)),          # weights resident across steps
            pl.BlockSpec(b1.shape, lambda i: (0, 0)),
            pl.BlockSpec(w2_bf.shape, lambda i: (0, 0)),
            pl.BlockSpec(b2.shape, lambda i: (0, 0)),
            pl.BlockSpec(w3_p.shape, lambda i: (0, 0)),
            pl.BlockSpec(b3_p.shape, lambda i: (0, 0)),
        ],
        out_specs=pl.BlockSpec((tm, out_pad), lambda i: (i, 0)),
        compiler_params=pltpu.CompilerParams(
            dimension_semantics=("parallel",),
        ),
    )(x_bf, w1_bf, b1, w2_bf, b2, w3_p, b3_p)

    return out[:B, :out_size]


def init_params(key, in_size, out_size):
    """Deterministic init mimicking nn.Linear's uniform(-1/sqrt(fan_in), 1/sqrt(fan_in))."""
    def linear(k, fin, fout):
        kw, kb = jax.random.split(k)
        bound = 1.0 / jnp.sqrt(fin)
        w = jax.random.uniform(kw, (fin, fout), jnp.float32, -bound, bound)
        b = jax.random.uniform(kb, (1, fout), jnp.float32, -bound, bound)
        return w, b

    k1, k2, k3 = jax.random.split(key, 3)
    w1, b1 = linear(k1, in_size, 256)
    w2, b2 = linear(k2, 256, 128)
    w3, b3 = linear(k3, 128, out_size)
    return dict(w1=w1, b1=b1, w2=w2, b2=b2, w3=w3, b3=b3)


def reference_forward(x, params):
    """f32 reference mirroring the kernel's bf16 storage + f32 accumulation."""
    q = lambda a: a.astype(jnp.bfloat16).astype(jnp.float32)
    h1 = _leaky_relu(q(x) @ q(params["w1"]) + params["b1"])
    h2 = _leaky_relu(q(h1) @ q(params["w2"]) + params["b2"])
    return q(h2) @ q(params["w3"]) + params["b3"]


if __name__ == "__main__":
    key = jax.random.PRNGKey(0)
    k_param, k_x = jax.random.split(key)

    batch, in_size, out_size = 8, 32, 8
    params = init_params(k_param, in_size, out_size)
    x = jax.random.normal(k_x, (batch, in_size), jnp.float32)

    out = prediction_network_forward(x, params)
    out = jax.block_until_ready(out)

    ref = reference_forward(x, params)
    assert out.shape == (batch, out_size), f"bad shape {out.shape}"
    assert jnp.allclose(out, ref, atol=1e-2, rtol=1e-2), "mismatch vs reference"
    print("KERNEL_OK")
</pallas_src>

<mosaic_0001>
module attributes {stable_mosaic.version = 11 : i64} {
  func.func @mlp_kernel(%arg0: i32, %arg1: memref<8x32xbf16, #tpu.memory_space<vmem>>, %arg2: memref<32x256xbf16, #tpu.memory_space<vmem>>, %arg3: memref<1x256xf32, #tpu.memory_space<vmem>>, %arg4: memref<256x128xbf16, #tpu.memory_space<vmem>>, %arg5: memref<1x128xf32, #tpu.memory_space<vmem>>, %arg6: memref<128x128xbf16, #tpu.memory_space<vmem>>, %arg7: memref<1x128xf32, #tpu.memory_space<vmem>>, %arg8: memref<8x128xf32, #tpu.memory_space<vmem>>) attributes {dimension_semantics = [#tpu.dimension_semantics<parallel>], iteration_bounds = array<i64: 1>, scalar_prefetch = 0 : i64, scratch_operands = 0 : i64, tpu.core_type = #tpu.core_type<tc>, window_params = [{transform_indices = @transform_0, window_bounds = array<i64: 8, 32>}, {pipeline_mode = #tpu.pipeline_mode<synchronous>, transform_indices = @transform_1, window_bounds = array<i64: 32, 256>}, {pipeline_mode = #tpu.pipeline_mode<synchronous>, transform_indices = @transform_2, window_bounds = array<i64: 1, 256>}, {pipeline_mode = #tpu.pipeline_mode<synchronous>, transform_indices = @transform_3, window_bounds = array<i64: 256, 128>}, {pipeline_mode = #tpu.pipeline_mode<synchronous>, transform_indices = @transform_4, window_bounds = array<i64: 1, 128>}, {pipeline_mode = #tpu.pipeline_mode<synchronous>, transform_indices = @transform_5, window_bounds = array<i64: 128, 128>}, {pipeline_mode = #tpu.pipeline_mode<synchronous>, transform_indices = @transform_6, window_bounds = array<i64: 1, 128>}, {transform_indices = @transform_7, window_bounds = array<i64: 8, 128>}]} {
    %c0 = arith.constant 0 : index
    %c0_0 = arith.constant 0 : index
    %0 = vector.load %arg1[%c0, %c0_0] : memref<8x32xbf16, #tpu.memory_space<vmem>>, vector<8x32xbf16>
    %c0_1 = arith.constant 0 : index
    %c0_2 = arith.constant 0 : index
    %1 = vector.load %arg2[%c0_1, %c0_2] : memref<32x256xbf16, #tpu.memory_space<vmem>>, vector<32x256xbf16>
    %cst = arith.constant dense<0.000000e+00> : vector<8x256xf32>
    %2 = tpu.matmul %0, %1, %cst {dimension_numbers = #tpu.dot_dimension_numbers<[1], [0], [0], [1], [0, 0, 1, 1], [], []>} : vector<8x32xbf16>, vector<32x256xbf16>, vector<8x256xf32> -> vector<8x256xf32>
    %c0_3 = arith.constant 0 : index
    %c0_4 = arith.constant 0 : index
    %3 = vector.load %arg3[%c0_3, %c0_4] : memref<1x256xf32, #tpu.memory_space<vmem>>, vector<1x256xf32>
    %4 = vector.broadcast %3 : vector<1x256xf32> to vector<8x256xf32>
    %5 = arith.addf %2, %4 : vector<8x256xf32>
    %cst_5 = arith.constant 0.000000e+00 : f32
    %6 = vector.broadcast %cst_5 : f32 to vector<8x256xf32>
    %7 = arith.cmpf ogt, %5, %6 : vector<8x256xf32>
    %cst_6 = arith.constant 0.00999999977 : f32
    %8 = vector.broadcast %cst_6 : f32 to vector<8x256xf32>
    %9 = arith.mulf %8, %5 : vector<8x256xf32>
    %10 = arith.select %7, %5, %9 : vector<8x256xi1>, vector<8x256xf32>
    %11 = arith.truncf %10 : vector<8x256xf32> to vector<8x256xbf16>
    %c0_7 = arith.constant 0 : index
    %c0_8 = arith.constant 0 : index
    %12 = vector.load %arg4[%c0_7, %c0_8] : memref<256x128xbf16, #tpu.memory_space<vmem>>, vector<256x128xbf16>
    %cst_9 = arith.constant dense<0.000000e+00> : vector<8x128xf32>
    %13 = tpu.matmul %11, %12, %cst_9 {dimension_numbers = #tpu.dot_dimension_numbers<[1], [0], [0], [1], [0, 0, 1, 1], [], []>} : vector<8x256xbf16>, vector<256x128xbf16>, vector<8x128xf32> -> vector<8x128xf32>
    %c0_10 = arith.constant 0 : index
    %c0_11 = arith.constant 0 : index
    %14 = vector.load %arg5[%c0_10, %c0_11] : memref<1x128xf32, #tpu.memory_space<vmem>>, vector<1x128xf32>
    %15 = vector.broadcast %14 : vector<1x128xf32> to vector<8x128xf32>
    %16 = arith.addf %13, %15 : vector<8x128xf32>
    %cst_12 = arith.constant 0.000000e+00 : f32
    %17 = vector.broadcast %cst_12 : f32 to vector<8x128xf32>
    %18 = arith.cmpf ogt, %16, %17 : vector<8x128xf32>
    %cst_13 = arith.constant 0.00999999977 : f32
    %19 = vector.broadcast %cst_13 : f32 to vector<8x128xf32>
    %20 = arith.mulf %19, %16 : vector<8x128xf32>
    %21 = arith.select %18, %16, %20 : vector<8x128xi1>, vector<8x128xf32>
    %22 = arith.truncf %21 : vector<8x128xf32> to vector<8x128xbf16>
    %c0_14 = arith.constant 0 : index
    %c0_15 = arith.constant 0 : index
    %23 = vector.load %arg6[%c0_14, %c0_15] : memref<128x128xbf16, #tpu.memory_space<vmem>>, vector<128x128xbf16>
    %cst_16 = arith.constant dense<0.000000e+00> : vector<8x128xf32>
    %24 = tpu.matmul %22, %23, %cst_16 {dimension_numbers = #tpu.dot_dimension_numbers<[1], [0], [0], [1], [0, 0, 1, 1], [], []>} : vector<8x128xbf16>, vector<128x128xbf16>, vector<8x128xf32> -> vector<8x128xf32>
    %c0_17 = arith.constant 0 : index
    %c0_18 = arith.constant 0 : index
    %25 = vector.load %arg7[%c0_17, %c0_18] : memref<1x128xf32, #tpu.memory_space<vmem>>, vector<1x128xf32>
    %26 = vector.broadcast %25 : vector<1x128xf32> to vector<8x128xf32>
    %27 = arith.addf %24, %26 : vector<8x128xf32>
    %c0_19 = arith.constant 0 : index
    %c0_20 = arith.constant 0 : index
    %28 = vector.load %arg8[%c0_19, %c0_20] : memref<8x128xf32, #tpu.memory_space<vmem>>, vector<8x128xf32>
    tpu.vector_store %arg8[%c0_19, %c0_20], %27 {strides = array<i32>} : memref<8x128xf32, #tpu.memory_space<vmem>>, vector<8x128xf32>,
    return
  }
  func.func @transform_0(%arg0: i32) -> (i32, i32) {
    %c0_i32 = arith.constant 0 : i32
    %c0_i32_0 = arith.constant 0 : i32
    return %arg0, %c0_i32 : i32, i32
  }
  func.func @transform_1(%arg0: i32) -> (i32, i32) {
    %c0_i32 = arith.constant 0 : i32
    %c0_i32_0 = arith.constant 0 : i32
    %c0_i32_1 = arith.constant 0 : i32
    return %c0_i32, %c0_i32_0 : i32, i32
  }
  func.func @transform_2(%arg0: i32) -> (i32, i32) {
    %c0_i32 = arith.constant 0 : i32
    %c0_i32_0 = arith.constant 0 : i32
    %c0_i32_1 = arith.constant 0 : i32
    return %c0_i32, %c0_i32_0 : i32, i32
  }
  func.func @transform_3(%arg0: i32) -> (i32, i32) {
    %c0_i32 = arith.constant 0 : i32
    %c0_i32_0 = arith.constant 0 : i32
    %c0_i32_1 = arith.constant 0 : i32
    return %c0_i32, %c0_i32_0 : i32, i32
  }
  func.func @transform_4(%arg0: i32) -> (i32, i32) {
    %c0_i32 = arith.constant 0 : i32
    %c0_i32_0 = arith.constant 0 : i32
    %c0_i32_1 = arith.constant 0 : i32
    return %c0_i32, %c0_i32_0 : i32, i32
  }
  func.func @transform_5(%arg0: i32) -> (i32, i32) {
    %c0_i32 = arith.constant 0 : i32
    %c0_i32_0 = arith.constant 0 : i32
    %c0_i32_1 = arith.constant 0 : i32
    return %c0_i32, %c0_i32_0 : i32, i32
  }
  func.func @transform_6(%arg0: i32) -> (i32, i32) {
    %c0_i32 = arith.constant 0 : i32
    %c0_i32_0 = arith.constant 0 : i32
    %c0_i32_1 = arith.constant 0 : i32
    return %c0_i32, %c0_i32_0 : i32, i32
  }
  func.func @transform_7(%arg0: i32) -> (i32, i32) {
    %c0_i32 = arith.constant 0 : i32
    %c0_i32_0 = arith.constant 0 : i32
    return %arg0, %c0_i32 : i32, i32
  }
}

</mosaic_0001>

<llo_original>
// kernel: tpu_custom_call.1
$region0: #{tpu_custom_call.1}
  #allocation0 [shape = 'u32[]', space=smem, size = 0x4, offset = 0x4, fixed_abs, tag = 'smem constant byte address 0x4 - core index']
  #allocation1 [shape = 'u32[144,128]{1,0:T(1,128)}', space=vmem, size = 0x12000, scoped, tag = 'internal scratch']
  %s0 = inlined_call_operand.hbm [shape: bf16[8,32], index: 0, kind: input, shape index: {}]
  %s1 = inlined_call_operand.hbm [shape: bf16[32,256], index: 1, kind: input, shape index: {}]
  %s2 = inlined_call_operand.vmem [shape: f32[1,256], index: 2, kind: input, shape index: {}]
  %s3 = inlined_call_operand.hbm [shape: bf16[256,128], index: 3, kind: input, shape index: {}]
  %s4 = inlined_call_operand.vmem [shape: f32[1,128], index: 4, kind: input, shape index: {}]
  %s5 = inlined_call_operand.hbm [shape: bf16[128,128], index: 5, kind: input, shape index: {}]
  %s6 = inlined_call_operand.vmem [shape: f32[1,128], index: 6, kind: input, shape index: {}]
  %s7 = inlined_call_operand.hbm [shape: f32[8,128], index: 7, kind: output, shape index: {}]
  %s8 = sld [smem:[#allocation0]]
  $region54: #{tpu_custom_call.1} parent=0
    _
  %s10 = ssub.s32 1, %s8
  %s11 = scalar_select 0, %s10, %s8
  $region1: #{tpu_custom_call.1} parent=0
    #allocation2 [shape = 'u8[2048]{0}', space=vmem, size = 0x800, scoped, tag = 'input window, operand 0, single buffered']
    #allocation3 [shape = 's32[1]{0}', space=sflag, size = 0x4, scoped, tag = 'scoped memory for tpu_custom_call.1']
    #allocation4 [shape = 's32[1]{0}', space=sflag, size = 0x4, scoped, tag = 'scoped memory for tpu_custom_call.1']
    #allocation5 [shape = 'u8[16384]{0}', space=vmem, size = 0x4000, scoped, tag = 'input window, operand 1, single buffered']
    #allocation6 [shape = 's32[1]{0}', space=sflag, size = 0x4, scoped, tag = 'scoped memory for tpu_custom_call.1']
    #allocation7 [shape = 'u8[65536]{0}', space=vmem, size = 0x10000, scoped, tag = 'input window, operand 3, single buffered']
    #allocation8 [shape = 'u8[32768]{0}', space=vmem, size = 0x8000, scoped, tag = 'input window, operand 5, single buffered']
    #allocation9 [shape = 's32[1]{0}', space=sflag, size = 0x4, scoped, tag = 'scoped memory for tpu_custom_call.1']
    #allocation10 [shape = 'u8[4096]{0}', space=vmem, size = 0x1000, scoped, tag = 'output window, operand 0, single buffered']
    %12 = vsyncpa [#allocation3], 0
    %13 = vsyncpa [#allocation6], 0
    %14 = vsyncpa [#allocation9], 0
    %15 = vsyncpa [#allocation4], 0
    // Predicated region
    $region2: #{tpu_custom_call.1} parent=1 // pred_check
      _
    $region3: #{tpu_custom_call.1} parent=1 // pred_check_branch
      %17 = sbr.rel (0) target = $region5
    $region4: #{tpu_custom_call.1} parent=1 // pred_region
      %s19 = ssub.s32 64, 64
      %20 = vsyncadd [#allocation3], %s19
      %s22 = sshll.u32 [#allocation2], 4
      %s23 = int_to_ptr.vmem [resolvable:$true] %s22
      %25 = dma.hbm_to_vmem [thread:$0]  %s0, 64, %s23, [#allocation3]
    $region5: #{tpu_custom_call.1} parent=1 // pred_fallthru
      _
    // Predicated region
    $region6: #{tpu_custom_call.1} parent=1 // pred_check
      _
    $region7: #{tpu_custom_call.1} parent=1 // pred_check_branch
      %27 = sbr.rel (0) target = $region9
    $region8: #{tpu_custom_call.1} parent=1 // pred_region
      %s29 = ssub.s32 512, 512
      %30 = vsyncadd [#allocation6], %s29
      %s31 = sshll.u32 [#allocation5], 4
      %s32 = int_to_ptr.vmem [resolvable:$true] %s31
      %37 = dma.hbm_to_vmem [thread:$0]  %s1, 512, %s32, [#allocation6], 128, 128, 8
    $region9: #{tpu_custom_call.1} parent=1 // pred_fallthru
      _
    // Predicated region
    $region10: #{tpu_custom_call.1} parent=1 // pred_check
      _
    $region11: #{tpu_custom_call.1} parent=1 // pred_check_branch
      %39 = sbr.rel (0) target = $region13
    $region12: #{tpu_custom_call.1} parent=1 // pred_region
      _
    $region13: #{tpu_custom_call.1} parent=1 // pred_fallthru
      _
    // Predicated region
    $region14: #{tpu_custom_call.1} parent=1 // pred_check
      _
    $region15: #{tpu_custom_call.1} parent=1 // pred_check_branch
      %41 = sbr.rel (0) target = $region17
    $region16: #{tpu_custom_call.1} parent=1 // pred_region
      %s43 = ssub.s32 2048, 2048
      %44 = vsyncadd [#allocation6], %s43
      %s45 = sshll.u32 [#allocation7], 4
      %s46 = int_to_ptr.vmem [resolvable:$true] %s45
      %51 = dma.hbm_to_vmem [thread:$0]  %s3, 2048, %s46, [#allocation6], 64, 64, 4
    $region17: #{tpu_custom_call.1} parent=1 // pred_fallthru
      _
    // Predicated region
    $region18: #{tpu_custom_call.1} parent=1 // pred_check
      _
    $region19: #{tpu_custom_call.1} parent=1 // pred_check_branch
      %53 = sbr.rel (0) target = $region21
    $region20: #{tpu_custom_call.1} parent=1 // pred_region
      _
    $region21: #{tpu_custom_call.1} parent=1 // pred_fallthru
      _
    // Predicated region
    $region22: #{tpu_custom_call.1} parent=1 // pred_check
      _
    $region23: #{tpu_custom_call.1} parent=1 // pred_check_branch
      %55 = sbr.rel (0) target = $region25
    $region24: #{tpu_custom_call.1} parent=1 // pred_region
      %s57 = ssub.s32 1024, 1024
      %58 = vsyncadd [#allocation9], %s57
      %s59 = sshll.u32 [#allocation8], 4
      %s60 = int_to_ptr.vmem [resolvable:$true] %s59
      %65 = dma.hbm_to_vmem [thread:$0]  %s5, 1024, %s60, [#allocation9], 64, 64, 4
    $region25: #{tpu_custom_call.1} parent=1 // pred_fallthru
      _
    // Predicated region
    $region26: #{tpu_custom_call.1} parent=1 // pred_check
      _
    $region27: #{tpu_custom_call.1} parent=1 // pred_check_branch
      %67 = sbr.rel (0) target = $region29
    $region28: #{tpu_custom_call.1} parent=1 // pred_region
      _
    $region29: #{tpu_custom_call.1} parent=1 // pred_fallthru
      _
    // Predicated region
    $region30: #{tpu_custom_call.1} parent=1 // pred_check
      _
    $region31: #{tpu_custom_call.1} parent=1 // pred_check_branch
      %69 = sbr.rel (0) target = $region33
    $region32: #{tpu_custom_call.1} parent=1 // pred_region
      %70 = dma.done [#allocation3], 64
    $region33: #{tpu_custom_call.1} parent=1 // pred_fallthru
      _
    // Predicated region
    $region34: #{tpu_custom_call.1} parent=1 // pred_check
      _
    $region35: #{tpu_custom_call.1} parent=1 // pred_check_branch
      %72 = sbr.rel (0) target = $region37
    $region36: #{tpu_custom_call.1} parent=1 // pred_region
      %73 = dma.done [#allocation6], 512
    $region37: #{tpu_custom_call.1} parent=1 // pred_fallthru
      _
    // Predicated region
    $region38: #{tpu_custom_call.1} parent=1 // pred_check
      _
    $region39: #{tpu_custom_call.1} parent=1 // pred_check_branch
      %75 = sbr.rel (0) target = $region41
    $region40: #{tpu_custom_call.1} parent=1 // pred_region
      %76 = dma.done [#allocation6], 2048
    $region41: #{tpu_custom_call.1} parent=1 // pred_fallthru
      _
    // Predicated region
    $region42: #{tpu_custom_call.1} parent=1 // pred_check
      _
    $region43: #{tpu_custom_call.1} parent=1 // pred_check_branch
      %78 = sbr.rel (0) target = $region45
    $region44: #{tpu_custom_call.1} parent=1 // pred_region
      %79 = dma.done [#allocation9], 1024
    $region45: #{tpu_custom_call.1} parent=1 // pred_fallthru
      _
    %v81 = vld [vmem:[#allocation2] sm:$0xf]
    %v82 = vld [vmem:[#allocation5] sm:$0xff]
    %v83 = vld [vmem:[#allocation5 + $0x8] sm:$0xff]
    %v84 = vld [vmem:[#allocation5 + $0x10] sm:$0xff]
    %v85 = vld [vmem:[#allocation5 + $0x18] sm:$0xff]
    %v86 = vld [vmem:[%s2] sm:$0x3]
    %v88 = vlaneseq
    %v89 = vshrl.u32 %v88, 7
    %v90 = vsub.s32 0, %v89
    %v91 = vrot.slane %v86, %v90
    %v92 = vlaneseq
    %v93 = vshrl.u32 %v92, 7
    %v94 = vsub.s32 1, %v93
    %v95 = vrot.slane %v86, %v94
    %v102 = vunpack.c.l.b16 %v82
    %v103 = vunpack.c.h.b16 %v82
    %v104 = vunpack.c.l.b16 %v83
    %v105 = vunpack.c.h.b16 %v83
    %v106 = vunpack.c.l.b16 %v84
    %v107 = vunpack.c.h.b16 %v84
    %v108 = vunpack.c.l.b16 %v85
    %v109 = vunpack.c.h.b16 %v85
    %v110 = vpack.c.b16 %v104, %v102
    %v111 = vpack.c.b16 %v105, %v103
    %v112 = vpack.c.b16 %v108, %v106
    %v113 = vpack.c.b16 %v109, %v107
    %vm118 = vcmask 261120
    %v120 = vsel %vm118, %v81, 0
    %122 = vmatprep.subr.bf16.mxu0 %v111
    %123 = vmatpush1.bf16.msra.mxu0 %v110
    %124 = vmatprep.subr.bf16.mxu0 %v113
    %125 = vmatpush1.bf16.msra.mxu0 %v112
    %126 = vmatprep.subr.bf16.mxu0 0
    %127 = vmatpush1.bf16.msra.mxu0 0
    %128 = vmatprep.subr.bf16.mxu0 0
    %129 = vmatpush1.bf16.msra.mxu0 0
    %130 = vmatprep.subr.bf16.mxu0 0
    %131 = vmatpush1.bf16.msra.mxu0 0
    %132 = vmatprep.subr.bf16.mxu0 0
    %133 = vmatpush1.bf16.msra.mxu0 0
    %134 = vmatprep.subr.bf16.mxu0 0
    %135 = vmatpush1.bf16.msra.mxu0 0
    %136 = vmatprep.subr.bf16.mxu0 0
    %137 = vmatpush1.bf16.msra.mxu0 0
    %138 = vmatprep.subr.bf16.mxu0 0
    %139 = vmatpush1.bf16.msra.mxu0 0
    %140 = vmatprep.subr.bf16.mxu0 0
    %141 = vmatpush1.bf16.msra.mxu0 0
    %142 = vmatprep.subr.bf16.mxu0 0
    %143 = vmatpush1.bf16.msra.mxu0 0
    %144 = vmatprep.subr.bf16.mxu0 0
    %145 = vmatpush1.bf16.msra.mxu0 0
    %146 = vmatprep.subr.bf16.mxu0 0
    %147 = vmatpush1.bf16.msra.mxu0 0
    %148 = vmatprep.subr.bf16.mxu0 0
    %149 = vmatpush1.bf16.msra.mxu0 0
    %150 = vmatprep.subr.bf16.mxu0 0
    %151 = vmatpush1.bf16.msra.mxu0 0
    %152 = vmatprep.subr.bf16.mxu0 0
    %153 = vmatpush1.bf16.msra.mxu0 0
    %154 = vmatprep.mubr.bf16.mxu0 0
    %155 = vmatmul.mubr.bf16.gmra.mrb[0].mxu0 %v120
    %v156 = vpop.f32.mrb[0].mxu0
    %v157 = vadd.f32 %v91, %v156
    %v158 = vpop.f32.mrb[0].mxu0
    %v159 = vadd.f32 %v95, %v158
    %v160 = vpop.f32.mrb[0].mxu0
    %v161 = vpop.f32.mrb[0].mxu0
    %162 = vdwg.mxu0
    %vm163 = vcmp.gt.f32.partialorder %v157, 0.0
    %vm164 = vcmp.gt.f32.partialorder %v159, 0.0
    %v165 = vmul.f32 %v157, 0.01
    %v166 = vmul.f32 %v159, 0.01
    %v167 = vsel %vm163, %v157, %v165
    %v168 = vsel %vm164, %v159, %v166
    %v169 = vpack.c.bf16 %v167, %v167
    %v170 = vpack.c.bf16 %v168, %v168
    %v171 = vld [vmem:[#allocation7] sm:$0xf]
    %v172 = vld [vmem:[#allocation7 + $0x4] sm:$0xf]
    %v173 = vld [vmem:[#allocation7 + $0x8] sm:$0xf]
    %v174 = vld [vmem:[#allocation7 + $0xc] sm:$0xf]
    %v175 = vld [vmem:[#allocation7 + $0x10] sm:$0xf]
    %v176 = vld [vmem:[#allocation7 + $0x14] sm:$0xf]
    %v177 = vld [vmem:[#allocation7 + $0x18] sm:$0xf]
    %v178 = vld [vmem:[#allocation7 + $0x1c] sm:$0xf]
    %v179 = vld [vmem:[#allocation7 + $0x20] sm:$0xf]
    %v180 = vld [vmem:[#allocation7 + $0x24] sm:$0xf]
    %v181 = vld [vmem:[#allocation7 + $0x28] sm:$0xf]
    %v182 = vld [vmem:[#allocation7 + $0x2c] sm:$0xf]
    %v183 = vld [vmem:[#allocation7 + $0x30] sm:$0xf]
    %v184 = vld [vmem:[#allocation7 + $0x34] sm:$0xf]
    %v185 = vld [vmem:[#allocation7 + $0x38] sm:$0xf]
    %v186 = vld [vmem:[#allocation7 + $0x3c] sm:$0xf]
    %v187 = vld [vmem:[#allocation7 + $0x40] sm:$0xf]
    %v188 = vld [vmem:[#allocation7 + $0x44] sm:$0xf]
    %v189 = vld [vmem:[#allocation7 + $0x48] sm:$0xf]
    %v190 = vld [vmem:[#allocation7 + $0x4c] sm:$0xf]
    %v191 = vld [vmem:[#allocation7 + $0x50] sm:$0xf]
    %v192 = vld [vmem:[#allocation7 + $0x54] sm:$0xf]
    %v193 = vld [vmem:[#allocation7 + $0x58] sm:$0xf]
    %v194 = vld [vmem:[#allocation7 + $0x5c] sm:$0xf]
    %v195 = vld [vmem:[#allocation7 + $0x60] sm:$0xf]
    %v196 = vld [vmem:[#allocation7 + $0x64] sm:$0xf]
    %v197 = vld [vmem:[#allocation7 + $0x68] sm:$0xf]
    %v198 = vld [vmem:[#allocation7 + $0x6c] sm:$0xf]
    %v199 = vld [vmem:[#allocation7 + $0x70] sm:$0xf]
    %v200 = vld [vmem:[#allocation7 + $0x74] sm:$0xf]
    %v201 = vld [vmem:[#allocation7 + $0x78] sm:$0xf]
    %v202 = vld [vmem:[#allocation7 + $0x7c] sm:$0xf]
    %v203 = vld [vmem:[%s4] sm:$0x1]
    %v205 = vlaneseq
    %v206 = vshrl.u32 %v205, 7
    %v207 = vsub.s32 0, %v206
    %v208 = vrot.slane %v203, %v207
    %v242 = vunpack.c.l.b16 %v171
    %v243 = vunpack.c.l.b16 %v172
    %v244 = vunpack.c.l.b16 %v173
    %v245 = vunpack.c.l.b16 %v174
    %v246 = vunpack.c.l.b16 %v175
    %v247 = vunpack.c.l.b16 %v176
    %v248 = vunpack.c.l.b16 %v177
    %v249 = vunpack.c.l.b16 %v178
    %v250 = vunpack.c.l.b16 %v179
    %v251 = vunpack.c.l.b16 %v180
    %v252 = vunpack.c.l.b16 %v181
    %v253 = vunpack.c.l.b16 %v182
    %v254 = vunpack.c.l.b16 %v183
    %v255 = vunpack.c.l.b16 %v184
    %v256 = vunpack.c.l.b16 %v185
    %v257 = vunpack.c.l.b16 %v186
    %v258 = vunpack.c.l.b16 %v187
    %v259 = vunpack.c.l.b16 %v188
    %v260 = vunpack.c.l.b16 %v189
    %v261 = vunpack.c.l.b16 %v190
    %v262 = vunpack.c.l.b16 %v191
    %v263 = vunpack.c.l.b16 %v192
    %v264 = vunpack.c.l.b16 %v193
    %v265 = vunpack.c.l.b16 %v194
    %v266 = vunpack.c.l.b16 %v195
    %v267 = vunpack.c.l.b16 %v196
    %v268 = vunpack.c.l.b16 %v197
    %v269 = vunpack.c.l.b16 %v198
    %v270 = vunpack.c.l.b16 %v199
    %v271 = vunpack.c.l.b16 %v200
    %v272 = vunpack.c.l.b16 %v201
    %v273 = vunpack.c.l.b16 %v202
    %v274 = vpack.c.b16 %v243, %v242
    %v275 = vpack.c.b16 %v245, %v244
    %v276 = vpack.c.b16 %v247, %v246
    %v277 = vpack.c.b16 %v249, %v248
    %v278 = vpack.c.b16 %v251, %v250
    %v279 = vpack.c.b16 %v253, %v252
    %v280 = vpack.c.b16 %v255, %v254
    %v281 = vpack.c.b16 %v257, %v256
    %v282 = vpack.c.b16 %v259, %v258
    %v283 = vpack.c.b16 %v261, %v260
    %v284 = vpack.c.b16 %v263, %v262
    %v285 = vpack.c.b16 %v265, %v264
    %v286 = vpack.c.b16 %v267, %v266
    %v287 = vpack.c.b16 %v269, %v268
    %v288 = vpack.c.b16 %v271, %v270
    %v289 = vpack.c.b16 %v273, %v272
    %306 = vmatprep.subr.bf16.mxu0 0
    %307 = vmatpush1.bf16.msra.mxu0 %v274
    %308 = vmatprep.subr.bf16.mxu0 0
    %309 = vmatpush1.bf16.msra.mxu0 %v275
    %310 = vmatprep.subr.bf16.mxu0 0
    %311 = vmatpush1.bf16.msra.mxu0 %v276
    %312 = vmatprep.subr.bf16.mxu0 0
    %313 = vmatpush1.bf16.msra.mxu0 %v277
    %314 = vmatprep.subr.bf16.mxu0 0
    %315 = vmatpush1.bf16.msra.mxu0 %v278
    %316 = vmatprep.subr.bf16.mxu0 0
    %317 = vmatpush1.bf16.msra.mxu0 %v279
    %318 = vmatprep.subr.bf16.mxu0 0
    %319 = vmatpush1.bf16.msra.mxu0 %v280
    %320 = vmatprep.subr.bf16.mxu0 0
    %321 = vmatpush1.bf16.msra.mxu0 %v281
    %322 = vmatprep.subr.bf16.mxu0 0
    %323 = vmatpush1.bf16.msra.mxu0 %v282
    %324 = vmatprep.subr.bf16.mxu0 0
    %325 = vmatpush1.bf16.msra.mxu0 %v283
    %326 = vmatprep.subr.bf16.mxu0 0
    %327 = vmatpush1.bf16.msra.mxu0 %v284
    %328 = vmatprep.subr.bf16.mxu0 0
    %329 = vmatpush1.bf16.msra.mxu0 %v285
    %330 = vmatprep.subr.bf16.mxu0 0
    %331 = vmatpush1.bf16.msra.mxu0 %v286
    %332 = vmatprep.subr.bf16.mxu0 0
    %333 = vmatpush1.bf16.msra.mxu0 %v287
    %334 = vmatprep.subr.bf16.mxu0 0
    %335 = vmatpush1.bf16.msra.mxu0 %v288
    %336 = vmatprep.subr.bf16.mxu0 0
    %337 = vmatpush1.bf16.msra.mxu0 %v289
    %338 = vmatprep.mubr.bf16.mxu0 %v170
    %339 = vmatmul.mubr.bf16.gmra.mrb[0].mxu0 %v169
    %v340 = vpop.f32.mrb[0].mxu0
    %v341 = vadd.f32 %v208, %v340
    %v342 = vpop.f32.mrb[0].mxu0
    %v343 = vpop.f32.mrb[0].mxu0
    %v344 = vpop.f32.mrb[0].mxu0
    %345 = vdwg.mxu0
    %vm346 = vcmp.gt.f32.partialorder %v341, 0.0
    %v347 = vmul.f32 %v341, 0.01
    %v348 = vsel %vm346, %v341, %v347
    %v349 = vpack.c.bf16 %v348, %v348
    %v350 = vld [vmem:[#allocation8] sm:$0xf]
    %v351 = vld [vmem:[#allocation8 + $0x4] sm:$0xf]
    %v352 = vld [vmem:[#allocation8 + $0x8] sm:$0xf]
    %v353 = vld [vmem:[#allocation8 + $0xc] sm:$0xf]
    %v354 = vld [vmem:[#allocation8 + $0x10] sm:$0xf]
    %v355 = vld [vmem:[#allocation8 + $0x14] sm:$0xf]
    %v356 = vld [vmem:[#allocation8 + $0x18] sm:$0xf]
    %v357 = vld [vmem:[#allocation8 + $0x1c] sm:$0xf]
    %v358 = vld [vmem:[#allocation8 + $0x20] sm:$0xf]
    %v359 = vld [vmem:[#allocation8 + $0x24] sm:$0xf]
    %v360 = vld [vmem:[#allocation8 + $0x28] sm:$0xf]
    %v361 = vld [vmem:[#allocation8 + $0x2c] sm:$0xf]
    %v362 = vld [vmem:[#allocation8 + $0x30] sm:$0xf]
    %v363 = vld [vmem:[#allocation8 + $0x34] sm:$0xf]
    %v364 = vld [vmem:[#allocation8 + $0x38] sm:$0xf]
    %v365 = vld [vmem:[#allocation8 + $0x3c] sm:$0xf]
    %v366 = vld [vmem:[%s6] sm:$0x1]
    %v368 = vlaneseq
    %v369 = vshrl.u32 %v368, 7
    %v370 = vsub.s32 0, %v369
    %v371 = vrot.slane %v366, %v370
    %v389 = vunpack.c.l.b16 %v350
    %v390 = vunpack.c.l.b16 %v351
    %v391 = vunpack.c.l.b16 %v352
    %v392 = vunpack.c.l.b16 %v353
    %v393 = vunpack.c.l.b16 %v354
    %v394 = vunpack.c.l.b16 %v355
    %v395 = vunpack.c.l.b16 %v356
    %v396 = vunpack.c.l.b16 %v357
    %v397 = vunpack.c.l.b16 %v358
    %v398 = vunpack.c.l.b16 %v359
    %v399 = vunpack.c.l.b16 %v360
    %v400 = vunpack.c.l.b16 %v361
    %v401 = vunpack.c.l.b16 %v362
    %v402 = vunpack.c.l.b16 %v363
    %v403 = vunpack.c.l.b16 %v364
    %v404 = vunpack.c.l.b16 %v365
    %v405 = vpack.c.b16 %v390, %v389
    %v406 = vpack.c.b16 %v392, %v391
    %v407 = vpack.c.b16 %v394, %v393
    %v408 = vpack.c.b16 %v396, %v395
    %v409 = vpack.c.b16 %v398, %v397
    %v410 = vpack.c.b16 %v400, %v399
    %v411 = vpack.c.b16 %v402, %v401
    %v412 = vpack.c.b16 %v404, %v403
    %421 = vmatprep.subr.bf16.mxu0 0
    %422 = vmatpush1.bf16.msra.mxu0 %v405
    %423 = vmatprep.subr.bf16.mxu0 0
    %424 = vmatpush1.bf16.msra.mxu0 %v406
    %425 = vmatprep.subr.bf16.mxu0 0
    %426 = vmatpush1.bf16.msra.mxu0 %v407
    %427 = vmatprep.subr.bf16.mxu0 0
    %428 = vmatpush1.bf16.msra.mxu0 %v408
    %429 = vmatprep.subr.bf16.mxu0 0
    %430 = vmatpush1.bf16.msra.mxu0 %v409
    %431 = vmatprep.subr.bf16.mxu0 0
    %432 = vmatpush1.bf16.msra.mxu0 %v410
    %433 = vmatprep.subr.bf16.mxu0 0
    %434 = vmatpush1.bf16.msra.mxu0 %v411
    %435 = vmatprep.subr.bf16.mxu0 0
    %436 = vmatpush1.bf16.msra.mxu0 %v412
    %437 = vmatprep.subr.bf16.mxu0 0
    %438 = vmatpush1.bf16.msra.mxu0 0
    %439 = vmatprep.subr.bf16.mxu0 0
    %440 = vmatpush1.bf16.msra.mxu0 0
    %441 = vmatprep.subr.bf16.mxu0 0
    %442 = vmatpush1.bf16.msra.mxu0 0
    %443 = vmatprep.subr.bf16.mxu0 0
    %444 = vmatpush1.bf16.msra.mxu0 0
    %445 = vmatprep.subr.bf16.mxu0 0
    %446 = vmatpush1.bf16.msra.mxu0 0
    %447 = vmatprep.subr.bf16.mxu0 0
    %448 = vmatpush1.bf16.msra.mxu0 0
    %449 = vmatprep.subr.bf16.mxu0 0
    %450 = vmatpush1.bf16.msra.mxu0 0
    %451 = vmatprep.subr.bf16.mxu0 0
    %452 = vmatpush1.bf16.msra.mxu0 0
    %453 = vmatprep.mubr.bf16.mxu0 0
    %454 = vmatmul.mubr.bf16.gmra.mrb[0].mxu0 %v349
    %v455 = vpop.f32.mrb[0].mxu0
    %v456 = vadd.f32 %v371, %v455
    %v457 = vpop.f32.mrb[0].mxu0
    %v458 = vpop.f32.mrb[0].mxu0
    %v459 = vpop.f32.mrb[0].mxu0
    %460 = vdwg.mxu0
    %461 = vst [vmem:[#allocation10] sm:$0xff] %v456
    // Predicated region
    $region46: #{tpu_custom_call.1} parent=1 // pred_check
      _
    $region47: #{tpu_custom_call.1} parent=1 // pred_check_branch
      %463 = sbr.rel (0) target = $region49
    $region48: #{tpu_custom_call.1} parent=1 // pred_region
      %s465 = ssub.s32 128, 128
      %466 = vsyncadd [#allocation4], %s465
      %s468 = sshll.u32 [#allocation10], 4
      %s469 = int_to_ptr.vmem [resolvable:$true] %s468
      %471 = dma.vmem_to_hbm [thread:$0]  %s469, 128, %s7, [#allocation4]
    $region49: #{tpu_custom_call.1} parent=1 // pred_fallthru
      _
    // Predicated region
    $region50: #{tpu_custom_call.1} parent=1 // pred_check
      _
    $region51: #{tpu_custom_call.1} parent=1 // pred_check_branch
      %473 = sbr.rel (0) target = $region53
    $region52: #{tpu_custom_call.1} parent=1 // pred_region
      %474 = dma.done [#allocation4], 128
    $region53: #{tpu_custom_call.1} parent=1 // pred_fallthru
      _
    %475 = vsyncpa [#allocation3], 1
    %476 = vsyncpa [#allocation6], 1
    %477 = vsyncpa [#allocation9], 1
    %478 = vsyncpa [#allocation4], 1

</llo_original>
